<compile_context>
chip_gen: v6e
topology: v6e:2x2x1
jax: 0.10.0
libtpu: 0.0.40
codegen_flags: <defaults>
</compile_context>

<pallas_src>
import math

import numpy as np
import jax
import jax.numpy as jnp
from jax.experimental import pallas as pl
from jax.experimental.pallas import tpu as pltpu


# ----------------------------- parameter setup -----------------------------

def _bilinear_1d(size):
    """1-D bilinear taps; outer(f, f) == get_upsample_filter(size)."""
    factor = (size + 1) // 2
    if size % 2 == 1:
        center = factor - 1
    else:
        center = factor - 0.5
    og = np.arange(size, dtype=np.float64)
    return (1.0 - np.abs(og - center) / factor).astype(np.float32)


def _upsample_matrix(n_in, factor):
    """(n_out, n_in) matrix s.t. y = A @ x is the 1-D transposed conv,
    stride=factor, kernel=2*factor, with bilinear taps."""
    k = 2 * factor
    f1d = _bilinear_1d(k)
    n_out = (n_in - 1) * factor + k
    a = np.zeros((n_out, n_in), np.float32)
    for i in range(n_in):
        a[i * factor:i * factor + k, i] += f1d
    return a


# --------------------------- VMEM / batch selection --------------------------

def _round_up(x, m):
    return -(-x // m) * m


def _vmem_capacity_bytes():
    try:
        return int(pltpu.get_tpu_info().vmem_capacity_bytes)
    except Exception:
        return 64 << 20          # conservative fallback: v7x per-TensorCore VMEM


def _vmem_per_step(b, h, w, ho, wo, itemsize):
    """Per-grid-step VMEM footprint including (sublane, 128-lane) tile padding."""
    sub = 8 * max(1, 4 // itemsize)        # sublane tile: 8 f32, 16 bf16, 32 int8
    ru = _round_up
    in_blk = 2 * ru(b * h, sub) * ru(w, 128) * itemsize      # double-buffered x slab
    out_blk = 2 * ru(b * ho, sub) * ru(wo, 128) * itemsize   # double-buffered out slab
    consts = 2 * (ru(ho, sub) * ru(h, 128) +                 # A_h   (2 bufs each)
                  ru(w, sub) * ru(wo, 128)) * itemsize       # A_w^T
    scratch = ru(b * ho, sub) * ru(w, 128) * itemsize        # flattened intermediate
    temps = ru(ho, 8) * ru(w, 128) * 4                       # per-plane f32 dot result
    return in_blk + out_blk + consts + scratch + temps


def _choose_batch(nc, h, w, ho, wo, itemsize, budget_bytes, max_unroll=64):
    """Planes per grid step. No divisor-of-nc requirement (nc is padded)."""
    sub = 8 * max(1, 4 // itemsize)
    # B*H and B*Ho are the sublane dims of the 2D input/output slabs; when the
    # grid has more than one step they must be multiples of the sublane tile.
    m = max(sub // math.gcd(h, sub), sub // math.gcd(ho, sub))
    b_cover = _round_up(nc, m)                     # one-step coverage of nc
    b_cap = min(b_cover, max(m, (max_unroll // m) * m))
    b_max = m
    while (b_max + m <= b_cap and
           _vmem_per_step(b_max + m, h, w, ho, wo, itemsize) <= budget_bytes):
        b_max += m

    def steps(b):
        return -(-nc // b)

    def pad(b):
        return steps(b) * b - nc

    def score(b):
        return (pad(b) == 0,            # avoid host pad + output slice copy
                -pad(b),                # otherwise minimize wasted planes
                steps(b) % 2 == 0,      # v7x: 2 TensorCores share the grid evenly
                b)                      # fewest steps -> least per-step overhead

    return max(range(m, b_max + 1, m), key=score)


# ------------------------------- Pallas kernel ------------------------------

def _upsample_kernel(ah_ref, awt_ref, x_ref, o_ref, t_ref):
    # ah_ref : (Ho, H)     A_h, resident across the grid
    # awt_ref: (W, Wo)     A_w^T, resident across the grid
    # x_ref  : (B*H, W)    B input planes flattened along the sublane axis
    # o_ref  : (B*Ho, Wo)  B output planes flattened (single lane-dense slab)
    # t_ref  : (B*Ho, W)   VMEM scratch (input dtype)
    Ho, H = ah_ref.shape
    B = x_ref.shape[0] // H
    ah = ah_ref[...]                     # hoisted: loaded once per grid step

    # Light H-side upsample, per plane (B is a small static unroll); results
    # land contiguously in the flattened scratch.  f32 accumulation, then cast
    # back to the input dtype so the heavy dot runs at native MXU rate.
    for b in range(B):
        xb = x_ref[b * H:(b + 1) * H, :]
        t_ref[b * Ho:(b + 1) * Ho, :] = jnp.dot(
            ah, xb, preferred_element_type=jnp.float32).astype(t_ref.dtype)

    # Heavy (factor^2-scaled) W-side upsample: ONE flattened big-M MXU call
    # producing the whole output block, stored directly as a 2D slab.
    o_ref[...] = jnp.dot(
        t_ref[...], awt_ref[...],
        preferred_element_type=jnp.float32).astype(o_ref.dtype)


def bilinear_upsample(x, factor):
    """Equivalent of Bilinear(factor, C).forward(x) for x of shape (N, C, H, W)."""
    N, C, H, W = x.shape
    k = 2 * factor
    Ho = (H - 1) * factor + k
    Wo = (W - 1) * factor + k
    NC = N * C
    dt = x.dtype
    itemsize = jnp.dtype(dt).itemsize

    # Separable 1-D upsampling matrices, built on the host; A_w pre-transposed
    # so there is no in-kernel transpose.  Kept in the input dtype: exact for
    # f32; exact in bf16 when `factor` is a power of two.  (For very large f32
    # planes one could cast operands to bf16 to avoid f32 MXU emulation; not
    # done here so f32 results stay bit-accurate vs the PyTorch reference.)
    a_h = jnp.asarray(_upsample_matrix(H, factor), dtype=dt)                           # (Ho, H)
    a_wT = jnp.asarray(np.ascontiguousarray(_upsample_matrix(W, factor).T), dtype=dt)  # (W, Wo)

    capacity = _vmem_capacity_bytes()
    budget = min(48 << 20, (capacity * 3) // 8)   # ~48 MiB on v5e/v6e, ~24 MiB on v7x
    B = _choose_batch(NC, H, W, Ho, Wo, itemsize, budget)
    steps = -(-NC // B)
    NC_pad = steps * B

    xf = x.reshape(NC, H, W)
    if NC_pad != NC:                      # plane-axis zero padding (B need not divide N*C)
        xf = jnp.pad(xf, ((0, NC_pad - NC), (0, 0), (0, 0)))
    xf2 = xf.reshape(NC_pad * H, W)       # host-side 2D slab (free row-major reshape)

    est = _vmem_per_step(B, H, W, Ho, Wo, itemsize)
    vmem_limit = int(min(max(32 << 20, 2 * est), capacity - (8 << 20)))

    flops = 2 * NC_pad * Ho * H * W + 2 * NC_pad * Ho * W * Wo
    bytes_accessed = (NC_pad * H * W + NC_pad * Ho * Wo + Ho * H + W * Wo) * itemsize

    out2 = pl.pallas_call(
        _upsample_kernel,
        out_shape=jax.ShapeDtypeStruct((NC_pad * Ho, Wo), dt),
        grid_spec=pltpu.PrefetchScalarGridSpec(
            num_scalar_prefetch=0,
            grid=(steps,),
            in_specs=[
                pl.BlockSpec((Ho, H), lambda i: (0, 0)),       # A_h   (resident constant)
                pl.BlockSpec((W, Wo), lambda i: (0, 0)),       # A_w^T (resident constant)
                pl.BlockSpec((B * H, W), lambda i: (i, 0)),    # B input planes / step
            ],
            out_specs=pl.BlockSpec((B * Ho, Wo), lambda i: (i, 0)),  # lane-dense 2D slab
            scratch_shapes=[pltpu.VMEM((B * Ho, W), dt)],
        ),
        compiler_params=pltpu.CompilerParams(
            dimension_semantics=("parallel",),
            vmem_limit_bytes=vmem_limit),
        cost_estimate=pl.CostEstimate(
            flops=flops, transcendentals=0, bytes_accessed=bytes_accessed),
    )(a_h, a_wT, xf2)

    out = out2.reshape(NC_pad, Ho, Wo)
    if NC_pad != NC:
        out = out[:NC]
    return out.reshape(N, C, Ho, Wo)


# ------------------------------ reference check ------------------------------

def _ref_conv_transpose2d_diag(x_np, factor):
    """Brute-force PyTorch-semantics conv_transpose2d with the channel-diagonal
    bilinear weight (numpy, verification only)."""
    N, C, H, W = x_np.shape
    k = 2 * factor
    f1d = _bilinear_1d(k)
    filt = np.outer(f1d, f1d).astype(np.float32)
    Ho, Wo = (H - 1) * factor + k, (W - 1) * factor + k
    out = np.zeros((N, C, Ho, Wo), np.float32)
    for ih in range(H):
        for iw in range(W):
            out[:, :, ih * factor:ih * factor + k, iw * factor:iw * factor + k] += (
                x_np[:, :, ih, iw][:, :, None, None] * filt[None, None]
            )
    return out


if __name__ == "__main__":
    factor = 2
    N, C, H, W = 2, 4, 16, 16

    key = jax.random.PRNGKey(0)
    x = jax.random.normal(key, (N, C, H, W), dtype=jnp.float32)

    y = bilinear_upsample(x, factor)
    y = jax.block_until_ready(y)

    y_ref = _ref_conv_transpose2d_diag(np.asarray(x), factor)
    assert y.shape == y_ref.shape, (y.shape, y_ref.shape)
    assert np.allclose(np.asarray(y), y_ref, atol=1e-4, rtol=1e-4)

    print("KERNEL_OK")
</pallas_src>

<mosaic_0001>
module attributes {stable_mosaic.version = 11 : i64} {
  func.func @_upsample_kernel(%arg0: i32, %arg1: memref<34x16xf32, #tpu.memory_space<vmem>>, %arg2: memref<16x34xf32, #tpu.memory_space<vmem>>, %arg3: memref<64x16xf32, #tpu.memory_space<vmem>>, %arg4: memref<136x34xf32, #tpu.memory_space<vmem>>, %arg5: memref<136x16xf32, #tpu.memory_space<vmem>>) attributes {dimension_semantics = [#tpu.dimension_semantics<parallel>], iteration_bounds = array<i64: 2>, scalar_prefetch = 0 : i64, scratch_operands = 1 : i64, tpu.core_type = #tpu.core_type<tc>, window_params = [{pipeline_mode = #tpu.pipeline_mode<synchronous>, transform_indices = @transform_0, window_bounds = array<i64: 34, 16>}, {pipeline_mode = #tpu.pipeline_mode<synchronous>, transform_indices = @transform_1, window_bounds = array<i64: 16, 34>}, {transform_indices = @transform_2, window_bounds = array<i64: 64, 16>}, {transform_indices = @transform_3, window_bounds = array<i64: 136, 34>}]} {
    %c0 = arith.constant 0 : index
    %c0_0 = arith.constant 0 : index
    %0 = vector.load %arg1[%c0, %c0_0] : memref<34x16xf32, #tpu.memory_space<vmem>>, vector<34x16xf32>
    %c0_1 = arith.constant 0 : index
    %c0_2 = arith.constant 0 : index
    %1 = vector.load %arg3[%c0_1, %c0_2] : memref<64x16xf32, #tpu.memory_space<vmem>>, vector<16x16xf32>
    %cst = arith.constant dense<0.000000e+00> : vector<34x16xf32>
    %2 = tpu.matmul %0, %1, %cst {dimension_numbers = #tpu.dot_dimension_numbers<[1], [0], [0], [1], [0, 0, 1, 1], [], []>} : vector<34x16xf32>, vector<16x16xf32>, vector<34x16xf32> -> vector<34x16xf32>
    %c0_3 = arith.constant 0 : index
    %c0_4 = arith.constant 0 : index
    %3 = vector.load %arg5[%c0_3, %c0_4] : memref<136x16xf32, #tpu.memory_space<vmem>>, vector<34x16xf32>
    tpu.vector_store %arg5[%c0_3, %c0_4], %2 {strides = array<i32>} : memref<136x16xf32, #tpu.memory_space<vmem>>, vector<34x16xf32>,
    %c16 = arith.constant 16 : index
    %c0_5 = arith.constant 0 : index
    %4 = vector.load %arg3[%c16, %c0_5] : memref<64x16xf32, #tpu.memory_space<vmem>>, vector<16x16xf32>
    %cst_6 = arith.constant dense<0.000000e+00> : vector<34x16xf32>
    %5 = tpu.matmul %0, %4, %cst_6 {dimension_numbers = #tpu.dot_dimension_numbers<[1], [0], [0], [1], [0, 0, 1, 1], [], []>} : vector<34x16xf32>, vector<16x16xf32>, vector<34x16xf32> -> vector<34x16xf32>
    %c34 = arith.constant 34 : index
    %c0_7 = arith.constant 0 : index
    %6 = vector.load %arg5[%c34, %c0_7] : memref<136x16xf32, #tpu.memory_space<vmem>>, vector<34x16xf32>
    tpu.vector_store %arg5[%c34, %c0_7], %5 {strides = array<i32>} : memref<136x16xf32, #tpu.memory_space<vmem>>, vector<34x16xf32>,
    %c32 = arith.constant 32 : index
    %c0_8 = arith.constant 0 : index
    %7 = vector.load %arg3[%c32, %c0_8] : memref<64x16xf32, #tpu.memory_space<vmem>>, vector<16x16xf32>
    %cst_9 = arith.constant dense<0.000000e+00> : vector<34x16xf32>
    %8 = tpu.matmul %0, %7, %cst_9 {dimension_numbers = #tpu.dot_dimension_numbers<[1], [0], [0], [1], [0, 0, 1, 1], [], []>} : vector<34x16xf32>, vector<16x16xf32>, vector<34x16xf32> -> vector<34x16xf32>
    %c68 = arith.constant 68 : index
    %c0_10 = arith.constant 0 : index
    %9 = vector.load %arg5[%c68, %c0_10] : memref<136x16xf32, #tpu.memory_space<vmem>>, vector<34x16xf32>
    tpu.vector_store %arg5[%c68, %c0_10], %8 {strides = array<i32>} : memref<136x16xf32, #tpu.memory_space<vmem>>, vector<34x16xf32>,
    %c48 = arith.constant 48 : index
    %c0_11 = arith.constant 0 : index
    %10 = vector.load %arg3[%c48, %c0_11] : memref<64x16xf32, #tpu.memory_space<vmem>>, vector<16x16xf32>
    %cst_12 = arith.constant dense<0.000000e+00> : vector<34x16xf32>
    %11 = tpu.matmul %0, %10, %cst_12 {dimension_numbers = #tpu.dot_dimension_numbers<[1], [0], [0], [1], [0, 0, 1, 1], [], []>} : vector<34x16xf32>, vector<16x16xf32>, vector<34x16xf32> -> vector<34x16xf32>
    %c102 = arith.constant 102 : index
    %c0_13 = arith.constant 0 : index
    %12 = vector.load %arg5[%c102, %c0_13] : memref<136x16xf32, #tpu.memory_space<vmem>>, vector<34x16xf32>
    tpu.vector_store %arg5[%c102, %c0_13], %11 {strides = array<i32>} : memref<136x16xf32, #tpu.memory_space<vmem>>, vector<34x16xf32>,
    %c0_14 = arith.constant 0 : index
    %c0_15 = arith.constant 0 : index
    %13 = vector.load %arg5[%c0_14, %c0_15] : memref<136x16xf32, #tpu.memory_space<vmem>>, vector<136x16xf32>
    %c0_16 = arith.constant 0 : index
    %c0_17 = arith.constant 0 : index
    %14 = vector.load %arg2[%c0_16, %c0_17] : memref<16x34xf32, #tpu.memory_space<vmem>>, vector<16x34xf32>
    %cst_18 = arith.constant dense<0.000000e+00> : vector<136x34xf32>
    %15 = tpu.matmul %13, %14, %cst_18 {dimension_numbers = #tpu.dot_dimension_numbers<[1], [0], [0], [1], [0, 0, 1, 1], [], []>} : vector<136x16xf32>, vector<16x34xf32>, vector<136x34xf32> -> vector<136x34xf32>
    %c0_19 = arith.constant 0 : index
    %c0_20 = arith.constant 0 : index
    %16 = vector.load %arg4[%c0_19, %c0_20] : memref<136x34xf32, #tpu.memory_space<vmem>>, vector<136x34xf32>
    tpu.vector_store %arg4[%c0_19, %c0_20], %15 {strides = array<i32>} : memref<136x34xf32, #tpu.memory_space<vmem>>, vector<136x34xf32>,
    return
  }
  func.func @transform_0(%arg0: i32) -> (i32, i32) {
    %c0_i32 = arith.constant 0 : i32
    %c0_i32_0 = arith.constant 0 : i32
    %c0_i32_1 = arith.constant 0 : i32
    return %c0_i32, %c0_i32_0 : i32, i32
  }
  func.func @transform_1(%arg0: i32) -> (i32, i32) {
    %c0_i32 = arith.constant 0 : i32
    %c0_i32_0 = arith.constant 0 : i32
    %c0_i32_1 = arith.constant 0 : i32
    return %c0_i32, %c0_i32_0 : i32, i32
  }
  func.func @transform_2(%arg0: i32) -> (i32, i32) {
    %c0_i32 = arith.constant 0 : i32
    %c0_i32_0 = arith.constant 0 : i32
    return %arg0, %c0_i32 : i32, i32
  }
  func.func @transform_3(%arg0: i32) -> (i32, i32) {
    %c0_i32 = arith.constant 0 : i32
    %c0_i32_0 = arith.constant 0 : i32
    return %arg0, %c0_i32 : i32, i32
  }
}

</mosaic_0001>

<llo_original>
// kernel: tpu_custom_call.1
$region0: #{tpu_custom_call.1}
  #allocation0 [shape = 'u32[]', space=smem, size = 0x4, offset = 0x4, fixed_abs, tag = 'smem constant byte address 0x4 - core index']
  #allocation1 [shape = 'u32[144,128]{1,0:T(1,128)}', space=vmem, size = 0x12000, scoped, tag = 'internal scratch']
  #allocation2 [shape = 'f32[136,16]{1,0:T(8,128)}', space=vmem, size = 0x11000, scoped, tag = 'scratch operand']
  %s0 = inlined_call_operand.vmem [shape: f32[34,16], index: 0, kind: input, shape index: {}]
  %s1 = inlined_call_operand.vmem [shape: f32[16,34], index: 1, kind: input, shape index: {}]
  %s2 = inlined_call_operand.vmem [shape: f32[128,16], index: 2, kind: input, shape index: {}]
  %s3 = inlined_call_operand.vmem [shape: f32[272,34], index: 3, kind: output, shape index: {}]
  %s4 = sld [smem:[#allocation0]]
  $region45: #{tpu_custom_call.1} parent=0
    _
  %s6 = ssub.s32 1, %s4
  %s7 = scalar_select 0, %s6, %s4
  loop: start=0, step=1, limit=4
  $region2: #{tpu_custom_call.1} parent=0 // loop_pre_header
    _
  $region3: #{tpu_custom_call.1} parent=0 // loop_header
    %s9 = sphi 0, %s13
    %p10 = scmp.ge.s32.totalorder %s9, 4
    %s17 = sphi 0, %s17
    %s19 = sphi 0, %s17
    %s20 = sphi 0, %s19
    %s34 = sphi 0, %s20
    %s38 = sphi 0, %s38
    %s40 = sphi 0, %s38
    %s41 = sphi 0, %s40
    %s55 = sphi 0, %s41
    %s61 = sphi 0, %s63
    %s64 = sphi 0, %s61
    %s65 = sphi 0, %s64
    %s81 = sphi 0, %s65
    %s87 = sphi 0, %s89
    %s90 = sphi 0, %s87
    %s91 = sphi 0, %s90
    %s107 = sphi 0, %s91
  $region4: #{tpu_custom_call.1} parent=0 // loop_header_branch
    %12 = sbr.rel (%p10) target = $region8
  $region5: #{tpu_custom_call.1} parent=0 // loop_body
    %s14 = ssub.s32 %s9, 1
    %s15 = ssub.s32 %s9, 2
    %s16 = sadd.s32 %s9, 1
    %s18 = sadd.s32 %s17, 1
    %p21 = scmp.eq.s32.totalorder %s9, 1
    %p22 = scmp.ne.s32.totalorder %s17, %s19
    %p23 = scmp.eq.s32.totalorder %s9, 0
    %p24 = por %p22, %p23
    %p25 = scmp.ne.s32.totalorder %s17, %s19
    %p26 = scmp.eq.s32.totalorder %s14, 1
    %p27 = por %p25, %p26
    %p28 = scmp.ne.s32.totalorder %s19, %s20
    %p29 = scmp.eq.s32.totalorder %s14, 0
    %p30 = por %p28, %p29
    %p31 = scmp.ne.s32.totalorder %s19, %s20
    %p32 = scmp.eq.s32.totalorder %s15, 1
    %p33 = por %p31, %p32
    %p35 = scmp.ne.s32.totalorder %s20, %s34
    %p36 = scmp.eq.s32.totalorder %s15, 0
    %p37 = por %p35, %p36
    %s39 = sadd.s32 %s38, 1
    %p42 = scmp.eq.s32.totalorder %s9, 1
    %p43 = scmp.ne.s32.totalorder %s38, %s40
    %p44 = scmp.eq.s32.totalorder %s9, 0
    %p45 = por %p43, %p44
    %p46 = scmp.ne.s32.totalorder %s38, %s40
    %p47 = scmp.eq.s32.totalorder %s14, 1
    %p48 = por %p46, %p47
    %p49 = scmp.ne.s32.totalorder %s40, %s41
    %p50 = scmp.eq.s32.totalorder %s14, 0
    %p51 = por %p49, %p50
    %p52 = scmp.ne.s32.totalorder %s40, %s41
    %p53 = scmp.eq.s32.totalorder %s15, 1
    %p54 = por %p52, %p53
    %p56 = scmp.ne.s32.totalorder %s41, %s55
    %p57 = scmp.eq.s32.totalorder %s15, 0
    %p58 = por %p56, %p57
    %s59 = ssub.s32 %s9, %s16
    %p60 = scmp.eq.s32.totalorder %s59, 0
    %s62 = sadd.s32 %s61, 1
    %s63 = scalar_select %p60, %s61, %s62
    %p66 = pneg %p60
    %p67 = scmp.eq.s32.totalorder %s9, 1
    %p68 = por %p66, %p67
    %p69 = scmp.ne.s32.totalorder %s61, %s64
    %p70 = scmp.eq.s32.totalorder %s9, 0
    %p71 = por %p69, %p70
    %p72 = scmp.ne.s32.totalorder %s61, %s64
    %p73 = scmp.eq.s32.totalorder %s14, 1
    %p74 = por %p72, %p73
    %p75 = scmp.ne.s32.totalorder %s64, %s65
    %p76 = scmp.eq.s32.totalorder %s14, 0
    %p77 = por %p75, %p76
    %p78 = scmp.ne.s32.totalorder %s64, %s65
    %p79 = scmp.eq.s32.totalorder %s15, 1
    %p80 = por %p78, %p79
    %p82 = scmp.ne.s32.totalorder %s65, %s81
    %p83 = scmp.eq.s32.totalorder %s15, 0
    %p84 = por %p82, %p83
    %s85 = ssub.s32 %s9, %s16
    %p86 = scmp.eq.s32.totalorder %s85, 0
    %s88 = sadd.s32 %s87, 1
    %s89 = scalar_select %p86, %s87, %s88
    %p92 = pneg %p86
    %p93 = scmp.eq.s32.totalorder %s9, 1
    %p94 = por %p92, %p93
    %p95 = scmp.ne.s32.totalorder %s87, %s90
    %p96 = scmp.eq.s32.totalorder %s9, 0
    %p97 = por %p95, %p96
    %p98 = scmp.ne.s32.totalorder %s87, %s90
    %p99 = scmp.eq.s32.totalorder %s14, 1
    %p100 = por %p98, %p99
    %p101 = scmp.ne.s32.totalorder %s90, %s91
    %p102 = scmp.eq.s32.totalorder %s14, 0
    %p103 = por %p101, %p102
    %p104 = scmp.ne.s32.totalorder %s90, %s91
    %p105 = scmp.eq.s32.totalorder %s15, 1
    %p106 = por %p104, %p105
    %p108 = scmp.ne.s32.totalorder %s91, %s107
    %p109 = scmp.eq.s32.totalorder %s15, 0
    %p110 = por %p108, %p109
    %p111 = scmp.le.s32.totalorder 1, %s9
    %p112 = scmp.lt.s32.totalorder %s9, 3
    %p113 = pnand %p111, %p112
    %p114 = pneg %p113
    // Predicated region
    $region9: #{tpu_custom_call.1} parent=5 // pred_check
      _
    $region10: #{tpu_custom_call.1} parent=5 // pred_check_branch
      %116 = sbr.rel (%p113) target = $region12
    $region11: #{tpu_custom_call.1} parent=5 // pred_region
      %s117 = ssub.s32 %s9, 1
      // Predicated region
      $region13: #{tpu_custom_call.1} parent=11 // pred_check
        %p118 = pneg %p30
      $region14: #{tpu_custom_call.1} parent=11 // pred_check_branch
        %120 = sbr.rel (%p118) target = $region16
      $region15: #{tpu_custom_call.1} parent=11 // pred_region
        _
      $region16: #{tpu_custom_call.1} parent=11 // pred_fallthru
        _
      // Predicated region
      $region17: #{tpu_custom_call.1} parent=11 // pred_check
        %p121 = pneg %p51
      $region18: #{tpu_custom_call.1} parent=11 // pred_check_branch
        %123 = sbr.rel (%p121) target = $region20
      $region19: #{tpu_custom_call.1} parent=11 // pred_region
        _
      $region20: #{tpu_custom_call.1} parent=11 // pred_fallthru
        _
    $region12: #{tpu_custom_call.1} parent=5 // pred_fallthru
      _
    %p124 = scmp.lt.s32.totalorder %s9, 2
    // Predicated region
    $region21: #{tpu_custom_call.1} parent=5 // pred_check
      %p125 = pneg %p124
    $region22: #{tpu_custom_call.1} parent=5 // pred_check_branch
      %127 = sbr.rel (%p125) target = $region24
    $region23: #{tpu_custom_call.1} parent=5 // pred_region
      // Predicated region
      $region25: #{tpu_custom_call.1} parent=23 // pred_check
        %p128 = pneg %p71
      $region26: #{tpu_custom_call.1} parent=23 // pred_check_branch
        %130 = sbr.rel (%p128) target = $region28
      $region27: #{tpu_custom_call.1} parent=23 // pred_region
        %s131 = smul.u32 8, %s9
        %p132 = scmp.lt.s32.totalorder %s131, 15
        %s133 = scalar_select %p132, %s131, 15
        %s134 = smul.addr %s133, 8
        %s135 = scalar_lea.vmem %s2, %s134
        %s136 = smul.u32 8, %s9
      $region28: #{tpu_custom_call.1} parent=23 // pred_fallthru
        _
    $region24: #{tpu_custom_call.1} parent=5 // pred_fallthru
      _
    %p137 = scmp.le.s32.totalorder 1, %s9
    %p138 = scmp.lt.s32.totalorder %s9, 3
    %p139 = pnand %p137, %p138
    %p140 = pneg %p139
    // Predicated region
    $region29: #{tpu_custom_call.1} parent=5 // pred_check
      _
    $region30: #{tpu_custom_call.1} parent=5 // pred_check_branch
      %142 = sbr.rel (%p139) target = $region32
    $region31: #{tpu_custom_call.1} parent=5 // pred_region
      %s143 = ssub.s32 %s9, 1
      %p144 = pneg %p30
      %p145 = pneg %p27
      %p146 = pneg %p51
      %p147 = pneg %p48
      %s148 = smul.u32 8, %s14
      %p149 = scmp.lt.s32.totalorder %s148, 15
      %s150 = scalar_select %p149, %s148, 15
      %s151 = smul.addr %s150, 8
      %s152 = scalar_lea.vmem %s2, %s151
      %p153 = pneg %p77
      %p154 = pneg %p74
      %p155 = pneg %p103
      %p156 = pneg %p100
      %s157 = smul.u32 17, %s14
      %p158 = scmp.lt.s32.totalorder %s157, 33
      %s159 = scalar_select %p158, %s157, 33
      %s160 = smul.addr %s159, 8
      %s161 = scalar_lea.vmem %s3, %s160
      %s162 = smul.u32 8, %s14
      %p163 = scmp.lt.s32.totalorder %s162, 15
      %s164 = scalar_select %p163, %s162, 15
      %s165 = smul.addr %s164, 8
      %s166 = scalar_lea.vmem %s2, %s165
      %s167 = smul.u32 8, %s14
      %s168 = smul.u32 17, %s14
      %p169 = scmp.lt.s32.totalorder %s168, 33
      %s170 = scalar_select %p169, %s168, 33
      %s171 = smul.addr %s170, 8
      %s172 = scalar_lea.vmem %s3, %s171
      %s173 = smul.u32 17, %s14
      %v174 = vld [vmem:[%s0] sm:$0xff]
      %v175 = vld [vmem:[%s0 + $0x8] sm:$0xff]
      %v176 = vld [vmem:[%s0 + $0x10] sm:$0xff]
      %v177 = vld [vmem:[%s0 + $0x18] sm:$0xff]
      %v178 = vld [vmem:[%s0 + $0x20] sm:$0x3]
      %v179 = vld [vmem:[%s166] sm:$0xff]
      %v180 = vld [vmem:[%s166 + $0x8] sm:$0xff]
      %vm181 = vcmask 130048
      %v183 = vsel %vm181, %v174, 0
      %v186 = vsel %vm181, %v175, 0
      %v189 = vsel %vm181, %v176, 0
      %v192 = vsel %vm181, %v177, 0
      %v195 = vsel %vm181, %v178, 0
      %197 = vmatprep.subr.mxu0 0.0
      %198 = vmatpush1.msra.mxu0 0.0
      %199 = vmatprep.subr.mxu0 0.0
      %200 = vmatpush1.msra.mxu0 0.0
      %201 = vmatprep.subr.mxu0 0.0
      %202 = vmatpush1.msra.mxu0 0.0
      %203 = vmatprep.subr.mxu0 0.0
      %204 = vmatpush1.msra.mxu0 0.0
      %205 = vmatprep.subr.mxu0 0.0
      %206 = vmatpush1.msra.mxu0 0.0
      %207 = vmatprep.subr.mxu0 0.0
      %208 = vmatpush1.msra.mxu0 0.0
      %209 = vmatprep.subr.mxu0 0.0
      %210 = vmatpush1.msra.mxu0 0.0
      %211 = vmatprep.subr.mxu0 0.0
      %212 = vmatpush1.msra.mxu0 0.0
      %213 = vmatprep.subr.mxu0 0.0
      %214 = vmatpush1.msra.mxu0 0.0
      %215 = vmatprep.subr.mxu0 0.0
      %216 = vmatpush1.msra.mxu0 0.0
      %217 = vmatprep.subr.mxu0 0.0
      %218 = vmatpush1.msra.mxu0 0.0
      %219 = vmatprep.subr.mxu0 0.0
      %220 = vmatpush1.msra.mxu0 0.0
      %221 = vmatprep.subr.mxu0 0.0
      %222 = vmatpush1.msra.mxu0 0.0
      %223 = vmatprep.subr.mxu0 0.0
      %224 = vmatpush1.msra.mxu0 0.0
      %225 = vmatprep.subr.mxu0 0.0
      %226 = vmatpush1.msra.mxu0 %v180
      %227 = vmatprep.subr.mxu0 0.0
      %228 = vmatpush1.msra.mxu0 %v179
      %229 = vmatprep.subr.mxu0 0.0
      %230 = vmatpush2.msra.mxu0 0.0
      %231 = vmatprep.subr.mxu0 0.0
      %232 = vmatpush2.msra.mxu0 0.0
      %233 = vmatprep.subr.mxu0 0.0
      %234 = vmatpush2.msra.mxu0 0.0
      %235 = vmatprep.subr.mxu0 0.0
      %236 = vmatpush2.msra.mxu0 0.0
      %237 = vmatprep.subr.mxu0 0.0
      %238 = vmatpush2.msra.mxu0 0.0
      %239 = vmatprep.subr.mxu0 0.0
      %240 = vmatpush2.msra.mxu0 0.0
      %241 = vmatprep.subr.mxu0 0.0
      %242 = vmatpush2.msra.mxu0 0.0
      %243 = vmatprep.subr.mxu0 0.0
      %244 = vmatpush2.msra.mxu0 0.0
      %245 = vmatprep.subr.mxu0 0.0
      %246 = vmatpush2.msra.mxu0 0.0
      %247 = vmatprep.subr.mxu0 0.0
      %248 = vmatpush2.msra.mxu0 0.0
      %249 = vmatprep.subr.mxu0 0.0
      %250 = vmatpush2.msra.mxu0 0.0
      %251 = vmatprep.subr.mxu0 0.0
      %252 = vmatpush2.msra.mxu0 0.0
      %253 = vmatprep.subr.mxu0 0.0
      %254 = vmatpush2.msra.mxu0 0.0
      %255 = vmatprep.subr.mxu0 0.0
      %256 = vmatpush2.msra.mxu0 0.0
      %257 = vmatprep.subr.mxu0 0.0
      %258 = vmatpush2.msra.mxu0 0.0
      %259 = vmatprep.subr.mxu0 0.0
      %260 = vmatpush2.msra.mxu0 0.0
      %261 = vmatprep.mubr.f32.mxu0 0.0
      %262 = vmatmul.mubr.f32.gmra.mxu0 %v183
      %v263 = vpop.f32.mrf.mxu0
      %v264 = vadd.f32 0.0, %v263
      %v265 = vpop.f32.mrf.mxu0
      %266 = vmatprep.mubr.f32.mxu0 0.0
      %267 = vmatmul.mubr.f32.gmra.mxu0 %v186
      %v268 = vpop.f32.mrf.mxu0
      %v269 = vadd.f32 0.0, %v268
      %v270 = vpop.f32.mrf.mxu0
      %271 = vmatprep.mubr.f32.mxu0 0.0
      %272 = vmatmul.mubr.f32.gmra.mxu0 %v189
      %v273 = vpop.f32.mrf.mxu0
      %v274 = vadd.f32 0.0, %v273
      %v275 = vpop.f32.mrf.mxu0
      %276 = vmatprep.mubr.f32.mxu0 0.0
      %277 = vmatmul.mubr.f32.gmra.mxu0 %v192
      %v278 = vpop.f32.mrf.mxu0
      %v279 = vadd.f32 0.0, %v278
      %v280 = vpop.f32.mrf.mxu0
      %281 = vmatprep.mubr.f32.mxu0 0.0
      %282 = vmatmul.mubr.f32.gmra.mxu0 %v195
      %v283 = vpop.f32.mrf.mxu0
      %v284 = vadd.f32 0.0, %v283
      %v285 = vpop.f32.mrf.mxu0
      %286 = vdwg.mxu0
      %287 = vst.msk [vmem:[#allocation2] sm:$0xff] %vm181, %v264
      %288 = vst.msk [vmem:[#allocation2 + $0x8] sm:$0xff] %vm181, %v269
      %289 = vst.msk [vmem:[#allocation2 + $0x10] sm:$0xff] %vm181, %v274
      %290 = vst.msk [vmem:[#allocation2 + $0x18] sm:$0xff] %vm181, %v279
      %vm291 = vcmask 123904
      %292 = vst.msk [vmem:[#allocation2 + $0x20] sm:$0x3] %vm291, %v284
      %v293 = vld [vmem:[%s166 + $0x10] sm:$0xff]
      %v294 = vld [vmem:[%s166 + $0x18] sm:$0xff]
      %295 = vmatprep.subr.mxu0 0.0
      %296 = vmatpush1.msra.mxu0 0.0
      %297 = vmatprep.subr.mxu0 0.0
      %298 = vmatpush1.msra.mxu0 0.0
      %299 = vmatprep.subr.mxu0 0.0
      %300 = vmatpush1.msra.mxu0 0.0
      %301 = vmatprep.subr.mxu0 0.0
      %302 = vmatpush1.msra.mxu0 0.0
      %303 = vmatprep.subr.mxu0 0.0
      %304 = vmatpush1.msra.mxu0 0.0
      %305 = vmatprep.subr.mxu0 0.0
      %306 = vmatpush1.msra.mxu0 0.0
      %307 = vmatprep.subr.mxu0 0.0
      %308 = vmatpush1.msra.mxu0 0.0
      %309 = vmatprep.subr.mxu0 0.0
      %310 = vmatpush1.msra.mxu0 0.0
      %311 = vmatprep.subr.mxu0 0.0
      %312 = vmatpush1.msra.mxu0 0.0
      %313 = vmatprep.subr.mxu0 0.0
      %314 = vmatpush1.msra.mxu0 0.0
      %315 = vmatprep.subr.mxu0 0.0
      %316 = vmatpush1.msra.mxu0 0.0
      %317 = vmatprep.subr.mxu0 0.0
      %318 = vmatpush1.msra.mxu0 0.0
      %319 = vmatprep.subr.mxu0 0.0
      %320 = vmatpush1.msra.mxu0 0.0
      %321 = vmatprep.subr.mxu0 0.0
      %322 = vmatpush1.msra.mxu0 0.0
      %323 = vmatprep.subr.mxu0 0.0
      %324 = vmatpush1.msra.mxu0 %v294
      %325 = vmatprep.subr.mxu0 0.0
      %326 = vmatpush1.msra.mxu0 %v293
      %327 = vmatprep.subr.mxu0 0.0
      %328 = vmatpush2.msra.mxu0 0.0
      %329 = vmatprep.subr.mxu0 0.0
      %330 = vmatpush2.msra.mxu0 0.0
      %331 = vmatprep.subr.mxu0 0.0
      %332 = vmatpush2.msra.mxu0 0.0
      %333 = vmatprep.subr.mxu0 0.0
      %334 = vmatpush2.msra.mxu0 0.0
      %335 = vmatprep.subr.mxu0 0.0
      %336 = vmatpush2.msra.mxu0 0.0
      %337 = vmatprep.subr.mxu0 0.0
      %338 = vmatpush2.msra.mxu0 0.0
      %339 = vmatprep.subr.mxu0 0.0
      %340 = vmatpush2.msra.mxu0 0.0
      %341 = vmatprep.subr.mxu0 0.0
      %342 = vmatpush2.msra.mxu0 0.0
      %343 = vmatprep.subr.mxu0 0.0
      %344 = vmatpush2.msra.mxu0 0.0
      %345 = vmatprep.subr.mxu0 0.0
      %346 = vmatpush2.msra.mxu0 0.0
      %347 = vmatprep.subr.mxu0 0.0
      %348 = vmatpush2.msra.mxu0 0.0
      %349 = vmatprep.subr.mxu0 0.0
      %350 = vmatpush2.msra.mxu0 0.0
      %351 = vmatprep.subr.mxu0 0.0
      %352 = vmatpush2.msra.mxu0 0.0
      %353 = vmatprep.subr.mxu0 0.0
      %354 = vmatpush2.msra.mxu0 0.0
      %355 = vmatprep.subr.mxu0 0.0
      %356 = vmatpush2.msra.mxu0 0.0
      %357 = vmatprep.subr.mxu0 0.0
      %358 = vmatpush2.msra.mxu0 0.0
      %359 = vmatprep.mubr.f32.mxu0 0.0
      %360 = vmatmul.mubr.f32.gmra.mxu0 %v183
      %v361 = vpop.f32.mrf.mxu0
      %v362 = vadd.f32 0.0, %v361
      %v363 = vpop.f32.mrf.mxu0
      %364 = vmatprep.mubr.f32.mxu0 0.0
      %365 = vmatmul.mubr.f32.gmra.mxu0 %v186
      %v366 = vpop.f32.mrf.mxu0
      %v367 = vadd.f32 0.0, %v366
      %v368 = vpop.f32.mrf.mxu0
      %369 = vmatprep.mubr.f32.mxu0 0.0
      %370 = vmatmul.mubr.f32.gmra.mxu0 %v189
      %v371 = vpop.f32.mrf.mxu0
      %v372 = vadd.f32 0.0, %v371
      %v373 = vpop.f32.mrf.mxu0
      %374 = vmatprep.mubr.f32.mxu0 0.0
      %375 = vmatmul.mubr.f32.gmra.mxu0 %v192
      %v376 = vpop.f32.mrf.mxu0
      %v377 = vadd.f32 0.0, %v376
      %v378 = vpop.f32.mrf.mxu0
      %379 = vmatprep.mubr.f32.mxu0 0.0
      %380 = vmatmul.mubr.f32.gmra.mxu0 %v195
      %v381 = vpop.f32.mrf.mxu0
      %v382 = vadd.f32 0.0, %v381
      %v383 = vpop.f32.mrf.mxu0
      %384 = vdwg.mxu0
      %385 = vst.msk [vmem:[#allocation2 + $0x22] sm:$0xff] %vm181, %v362
      %386 = vst.msk [vmem:[#allocation2 + $0x2a] sm:$0xff] %vm181, %v367
      %387 = vst.msk [vmem:[#allocation2 + $0x32] sm:$0xff] %vm181, %v372
      %388 = vst.msk [vmem:[#allocation2 + $0x3a] sm:$0xff] %vm181, %v377
      %389 = vst.msk [vmem:[#allocation2 + $0x42] sm:$0x3] %vm291, %v382
      %v390 = vld [vmem:[%s166 + $0x20] sm:$0xff]
      %v391 = vld [vmem:[%s166 + $0x28] sm:$0xff]
      %392 = vmatprep.subr.mxu0 0.0
      %393 = vmatpush1.msra.mxu0 0.0
      %394 = vmatprep.subr.mxu0 0.0
      %395 = vmatpush1.msra.mxu0 0.0
      %396 = vmatprep.subr.mxu0 0.0
      %397 = vmatpush1.msra.mxu0 0.0
      %398 = vmatprep.subr.mxu0 0.0
      %399 = vmatpush1.msra.mxu0 0.0
      %400 = vmatprep.subr.mxu0 0.0
      %401 = vmatpush1.msra.mxu0 0.0
      %402 = vmatprep.subr.mxu0 0.0
      %403 = vmatpush1.msra.mxu0 0.0
      %404 = vmatprep.subr.mxu0 0.0
      %405 = vmatpush1.msra.mxu0 0.0
      %406 = vmatprep.subr.mxu0 0.0
      %407 = vmatpush1.msra.mxu0 0.0
      %408 = vmatprep.subr.mxu0 0.0
      %409 = vmatpush1.msra.mxu0 0.0
      %410 = vmatprep.subr.mxu0 0.0
      %411 = vmatpush1.msra.mxu0 0.0
      %412 = vmatprep.subr.mxu0 0.0
      %413 = vmatpush1.msra.mxu0 0.0
      %414 = vmatprep.subr.mxu0 0.0
      %415 = vmatpush1.msra.mxu0 0.0
      %416 = vmatprep.subr.mxu0 0.0
      %417 = vmatpush1.msra.mxu0 0.0
      %418 = vmatprep.subr.mxu0 0.0
      %419 = vmatpush1.msra.mxu0 0.0
      %420 = vmatprep.subr.mxu0 0.0
      %421 = vmatpush1.msra.mxu0 %v391
      %422 = vmatprep.subr.mxu0 0.0
      %423 = vmatpush1.msra.mxu0 %v390
      %424 = vmatprep.subr.mxu0 0.0
      %425 = vmatpush2.msra.mxu0 0.0
      %426 = vmatprep.subr.mxu0 0.0
      %427 = vmatpush2.msra.mxu0 0.0
      %428 = vmatprep.subr.mxu0 0.0
      %429 = vmatpush2.msra.mxu0 0.0
      %430 = vmatprep.subr.mxu0 0.0
      %431 = vmatpush2.msra.mxu0 0.0
      %432 = vmatprep.subr.mxu0 0.0
      %433 = vmatpush2.msra.mxu0 0.0
      %434 = vmatprep.subr.mxu0 0.0
      %435 = vmatpush2.msra.mxu0 0.0
      %436 = vmatprep.subr.mxu0 0.0
      %437 = vmatpush2.msra.mxu0 0.0
      %438 = vmatprep.subr.mxu0 0.0
      %439 = vmatpush2.msra.mxu0 0.0
      %440 = vmatprep.subr.mxu0 0.0
      %441 = vmatpush2.msra.mxu0 0.0
      %442 = vmatprep.subr.mxu0 0.0
      %443 = vmatpush2.msra.mxu0 0.0
      %444 = vmatprep.subr.mxu0 0.0
      %445 = vmatpush2.msra.mxu0 0.0
      %446 = vmatprep.subr.mxu0 0.0
      %447 = vmatpush2.msra.mxu0 0.0
      %448 = vmatprep.subr.mxu0 0.0
      %449 = vmatpush2.msra.mxu0 0.0
      %450 = vmatprep.subr.mxu0 0.0
      %451 = vmatpush2.msra.mxu0 0.0
      %452 = vmatprep.subr.mxu0 0.0
      %453 = vmatpush2.msra.mxu0 0.0
      %454 = vmatprep.subr.mxu0 0.0
      %455 = vmatpush2.msra.mxu0 0.0
      %456 = vmatprep.mubr.f32.mxu0 0.0
      %457 = vmatmul.mubr.f32.gmra.mxu0 %v183
      %v458 = vpop.f32.mrf.mxu0
      %v459 = vadd.f32 0.0, %v458
      %v460 = vpop.f32.mrf.mxu0
      %461 = vmatprep.mubr.f32.mxu0 0.0
      %462 = vmatmul.mubr.f32.gmra.mxu0 %v186
      %v463 = vpop.f32.mrf.mxu0
      %v464 = vadd.f32 0.0, %v463
      %v465 = vpop.f32.mrf.mxu0
      %466 = vmatprep.mubr.f32.mxu0 0.0
      %467 = vmatmul.mubr.f32.gmra.mxu0 %v189
      %v468 = vpop.f32.mrf.mxu0
      %v469 = vadd.f32 0.0, %v468
      %v470 = vpop.f32.mrf.mxu0
      %471 = vmatprep.mubr.f32.mxu0 0.0
      %472 = vmatmul.mubr.f32.gmra.mxu0 %v192
      %v473 = vpop.f32.mrf.mxu0
      %v474 = vadd.f32 0.0, %v473
      %v475 = vpop.f32.mrf.mxu0
      %476 = vmatprep.mubr.f32.mxu0 0.0
      %477 = vmatmul.mubr.f32.gmra.mxu0 %v195
      %v478 = vpop.f32.mrf.mxu0
      %v479 = vadd.f32 0.0, %v478
      %v480 = vpop.f32.mrf.mxu0
      %481 = vdwg.mxu0
      %482 = vst.msk [vmem:[#allocation2 + $0x44] sm:$0xff] %vm181, %v459
      %483 = vst.msk [vmem:[#allocation2 + $0x4c] sm:$0xff] %vm181, %v464
      %484 = vst.msk [vmem:[#allocation2 + $0x54] sm:$0xff] %vm181, %v469
      %485 = vst.msk [vmem:[#allocation2 + $0x5c] sm:$0xff] %vm181, %v474
      %486 = vst.msk [vmem:[#allocation2 + $0x64] sm:$0x3] %vm291, %v479
      %v487 = vld [vmem:[%s166 + $0x30] sm:$0xff]
      %v488 = vld [vmem:[%s166 + $0x38] sm:$0xff]
      %489 = vmatprep.subr.mxu0 0.0
      %490 = vmatpush1.msra.mxu0 0.0
      %491 = vmatprep.subr.mxu0 0.0
      %492 = vmatpush1.msra.mxu0 0.0
      %493 = vmatprep.subr.mxu0 0.0
      %494 = vmatpush1.msra.mxu0 0.0
      %495 = vmatprep.subr.mxu0 0.0
      %496 = vmatpush1.msra.mxu0 0.0
      %497 = vmatprep.subr.mxu0 0.0
      %498 = vmatpush1.msra.mxu0 0.0
      %499 = vmatprep.subr.mxu0 0.0
      %500 = vmatpush1.msra.mxu0 0.0
      %501 = vmatprep.subr.mxu0 0.0
      %502 = vmatpush1.msra.mxu0 0.0
      %503 = vmatprep.subr.mxu0 0.0
      %504 = vmatpush1.msra.mxu0 0.0
      %505 = vmatprep.subr.mxu0 0.0
      %506 = vmatpush1.msra.mxu0 0.0
      %507 = vmatprep.subr.mxu0 0.0
      %508 = vmatpush1.msra.mxu0 0.0
      %509 = vmatprep.subr.mxu0 0.0
      %510 = vmatpush1.msra.mxu0 0.0
      %511 = vmatprep.subr.mxu0 0.0
      %512 = vmatpush1.msra.mxu0 0.0
      %513 = vmatprep.subr.mxu0 0.0
      %514 = vmatpush1.msra.mxu0 0.0
      %515 = vmatprep.subr.mxu0 0.0
      %516 = vmatpush1.msra.mxu0 0.0
      %517 = vmatprep.subr.mxu0 0.0
      %518 = vmatpush1.msra.mxu0 %v488
      %519 = vmatprep.subr.mxu0 0.0
      %520 = vmatpush1.msra.mxu0 %v487
      %521 = vmatprep.subr.mxu0 0.0
      %522 = vmatpush2.msra.mxu0 0.0
      %523 = vmatprep.subr.mxu0 0.0
      %524 = vmatpush2.msra.mxu0 0.0
      %525 = vmatprep.subr.mxu0 0.0
      %526 = vmatpush2.msra.mxu0 0.0
      %527 = vmatprep.subr.mxu0 0.0
      %528 = vmatpush2.msra.mxu0 0.0
      %529 = vmatprep.subr.mxu0 0.0
      %530 = vmatpush2.msra.mxu0 0.0
      %531 = vmatprep.subr.mxu0 0.0
      %532 = vmatpush2.msra.mxu0 0.0
      %533 = vmatprep.subr.mxu0 0.0
      %534 = vmatpush2.msra.mxu0 0.0
      %535 = vmatprep.subr.mxu0 0.0
      %536 = vmatpush2.msra.mxu0 0.0
      %537 = vmatprep.subr.mxu0 0.0
      %538 = vmatpush2.msra.mxu0 0.0
      %539 = vmatprep.subr.mxu0 0.0
      %540 = vmatpush2.msra.mxu0 0.0
      %541 = vmatprep.subr.mxu0 0.0
      %542 = vmatpush2.msra.mxu0 0.0
      %543 = vmatprep.subr.mxu0 0.0
      %544 = vmatpush2.msra.mxu0 0.0
      %545 = vmatprep.subr.mxu0 0.0
      %546 = vmatpush2.msra.mxu0 0.0
      %547 = vmatprep.subr.mxu0 0.0
      %548 = vmatpush2.msra.mxu0 0.0
      %549 = vmatprep.subr.mxu0 0.0
      %550 = vmatpush2.msra.mxu0 0.0
      %551 = vmatprep.subr.mxu0 0.0
      %552 = vmatpush2.msra.mxu0 0.0
      %553 = vmatprep.mubr.f32.mxu0 0.0
      %554 = vmatmul.mubr.f32.gmra.mxu0 %v183
      %v555 = vpop.f32.mrf.mxu0
      %v556 = vadd.f32 0.0, %v555
      %v557 = vpop.f32.mrf.mxu0
      %558 = vmatprep.mubr.f32.mxu0 0.0
      %559 = vmatmul.mubr.f32.gmra.mxu0 %v186
      %v560 = vpop.f32.mrf.mxu0
      %v561 = vadd.f32 0.0, %v560
      %v562 = vpop.f32.mrf.mxu0
      %563 = vmatprep.mubr.f32.mxu0 0.0
      %564 = vmatmul.mubr.f32.gmra.mxu0 %v189
      %v565 = vpop.f32.mrf.mxu0
      %v566 = vadd.f32 0.0, %v565
      %v567 = vpop.f32.mrf.mxu0
      %568 = vmatprep.mubr.f32.mxu0 0.0
      %569 = vmatmul.mubr.f32.gmra.mxu0 %v192
      %v570 = vpop.f32.mrf.mxu0
      %v571 = vadd.f32 0.0, %v570
      %v572 = vpop.f32.mrf.mxu0
      %573 = vmatprep.mubr.f32.mxu0 0.0
      %574 = vmatmul.mubr.f32.gmra.mxu0 %v195
      %v575 = vpop.f32.mrf.mxu0
      %v576 = vadd.f32 0.0, %v575
      %v577 = vpop.f32.mrf.mxu0
      %578 = vdwg.mxu0
      %579 = vst.msk [vmem:[#allocation2 + $0x66] sm:$0xff] %vm181, %v556
      %580 = vst.msk [vmem:[#allocation2 + $0x6e] sm:$0xff] %vm181, %v561
      %581 = vst.msk [vmem:[#allocation2 + $0x76] sm:$0xff] %vm181, %v566
      %582 = vst.msk [vmem:[#allocation2 + $0x7e] sm:$0xff] %vm181, %v571
      %583 = vst.msk [vmem:[#allocation2 + $0x86] sm:$0x3] %vm291, %v576
      %v584 = vld [vmem:[#allocation2] sm:$0xff]
      %v585 = vld [vmem:[#allocation2 + $0x8] sm:$0xff]
      %v586 = vld [vmem:[#allocation2 + $0x10] sm:$0xff]
      %v587 = vld [vmem:[#allocation2 + $0x18] sm:$0xff]
      %v588 = vld [vmem:[#allocation2 + $0x20] sm:$0xff]
      %v589 = vld [vmem:[#allocation2 + $0x28] sm:$0xff]
      %v590 = vld [vmem:[#allocation2 + $0x30] sm:$0xff]
      %v591 = vld [vmem:[#allocation2 + $0x38] sm:$0xff]
      %v592 = vld [vmem:[#allocation2 + $0x40] sm:$0xff]
      %v593 = vld [vmem:[#allocation2 + $0x48] sm:$0xff]
      %v594 = vld [vmem:[#allocation2 + $0x50] sm:$0xff]
      %v595 = vld [vmem:[#allocation2 + $0x58] sm:$0xff]
      %v596 = vld [vmem:[#allocation2 + $0x60] sm:$0xff]
      %v597 = vld [vmem:[#allocation2 + $0x68] sm:$0xff]
      %v598 = vld [vmem:[#allocation2 + $0x70] sm:$0xff]
      %v599 = vld [vmem:[#allocation2 + $0x78] sm:$0xff]
      %v600 = vld [vmem:[#allocation2 + $0x80] sm:$0xff]
      %v601 = vld [vmem:[%s1] sm:$0xff]
      %v602 = vld [vmem:[%s1 + $0x8] sm:$0xff]
      %v604 = vsel %vm181, %v584, 0
      %v607 = vsel %vm181, %v585, 0
      %v610 = vsel %vm181, %v586, 0
      %v613 = vsel %vm181, %v587, 0
      %v616 = vsel %vm181, %v588, 0
      %v619 = vsel %vm181, %v589, 0
      %v622 = vsel %vm181, %v590, 0
      %v625 = vsel %vm181, %v591, 0
      %v628 = vsel %vm181, %v592, 0
      %v631 = vsel %vm181, %v593, 0
      %v634 = vsel %vm181, %v594, 0
      %v637 = vsel %vm181, %v595, 0
      %v640 = vsel %vm181, %v596, 0
      %v643 = vsel %vm181, %v597, 0
      %v646 = vsel %vm181, %v598, 0
      %v649 = vsel %vm181, %v599, 0
      %v652 = vsel %vm181, %v600, 0
      %654 = vmatprep.subr.mxu0 0.0
      %655 = vmatpush1.msra.mxu0 0.0
      %656 = vmatprep.subr.mxu0 0.0
      %657 = vmatpush1.msra.mxu0 0.0
      %658 = vmatprep.subr.mxu0 0.0
      %659 = vmatpush1.msra.mxu0 0.0
      %660 = vmatprep.subr.mxu0 0.0
      %661 = vmatpush1.msra.mxu0 0.0
      %662 = vmatprep.subr.mxu0 0.0
      %663 = vmatpush1.msra.mxu0 0.0
      %664 = vmatprep.subr.mxu0 0.0
      %665 = vmatpush1.msra.mxu0 0.0
      %666 = vmatprep.subr.mxu0 0.0
      %667 = vmatpush1.msra.mxu0 0.0
      %668 = vmatprep.subr.mxu0 0.0
      %669 = vmatpush1.msra.mxu0 0.0
      %670 = vmatprep.subr.mxu0 0.0
      %671 = vmatpush1.msra.mxu0 0.0
      %672 = vmatprep.subr.mxu0 0.0
      %673 = vmatpush1.msra.mxu0 0.0
      %674 = vmatprep.subr.mxu0 0.0
      %675 = vmatpush1.msra.mxu0 0.0
      %676 = vmatprep.subr.mxu0 0.0
      %677 = vmatpush1.msra.mxu0 0.0
      %678 = vmatprep.subr.mxu0 0.0
      %679 = vmatpush1.msra.mxu0 0.0
      %680 = vmatprep.subr.mxu0 0.0
      %681 = vmatpush1.msra.mxu0 0.0
      %682 = vmatprep.subr.mxu0 0.0
      %683 = vmatpush1.msra.mxu0 %v602
      %684 = vmatprep.subr.mxu0 0.0
      %685 = vmatpush1.msra.mxu0 %v601
      %686 = vmatprep.subr.mxu0 0.0
      %687 = vmatpush2.msra.mxu0 0.0
      %688 = vmatprep.subr.mxu0 0.0
      %689 = vmatpush2.msra.mxu0 0.0
      %690 = vmatprep.subr.mxu0 0.0
      %691 = vmatpush2.msra.mxu0 0.0
      %692 = vmatprep.subr.mxu0 0.0
      %693 = vmatpush2.msra.mxu0 0.0
      %694 = vmatprep.subr.mxu0 0.0
      %695 = vmatpush2.msra.mxu0 0.0
      %696 = vmatprep.subr.mxu0 0.0
      %697 = vmatpush2.msra.mxu0 0.0
      %698 = vmatprep.subr.mxu0 0.0
      %699 = vmatpush2.msra.mxu0 0.0
      %700 = vmatprep.subr.mxu0 0.0
      %701 = vmatpush2.msra.mxu0 0.0
      %702 = vmatprep.subr.mxu0 0.0
      %703 = vmatpush2.msra.mxu0 0.0
      %704 = vmatprep.subr.mxu0 0.0
      %705 = vmatpush2.msra.mxu0 0.0
      %706 = vmatprep.subr.mxu0 0.0
      %707 = vmatpush2.msra.mxu0 0.0
      %708 = vmatprep.subr.mxu0 0.0
      %709 = vmatpush2.msra.mxu0 0.0
      %710 = vmatprep.subr.mxu0 0.0
      %711 = vmatpush2.msra.mxu0 0.0
      %712 = vmatprep.subr.mxu0 0.0
      %713 = vmatpush2.msra.mxu0 0.0
      %714 = vmatprep.subr.mxu0 0.0
      %715 = vmatpush2.msra.mxu0 0.0
      %716 = vmatprep.subr.mxu0 0.0
      %717 = vmatpush2.msra.mxu0 0.0
      %718 = vmatprep.mubr.f32.mxu0 0.0
      %719 = vmatmul.mubr.f32.gmra.mxu0 %v604
      %v720 = vpop.f32.mrf.mxu0
      %v721 = vadd.f32 0.0, %v720
      %v722 = vpop.f32.mrf.mxu0
      %723 = vmatprep.mubr.f32.mxu0 0.0
      %724 = vmatmul.mubr.f32.gmra.mxu0 %v607
      %v725 = vpop.f32.mrf.mxu0
      %v726 = vadd.f32 0.0, %v725
      %v727 = vpop.f32.mrf.mxu0
      %728 = vmatprep.mubr.f32.mxu0 0.0
      %729 = vmatmul.mubr.f32.gmra.mxu0 %v610
      %v730 = vpop.f32.mrf.mxu0
      %v731 = vadd.f32 0.0, %v730
      %v732 = vpop.f32.mrf.mxu0
      %733 = vmatprep.mubr.f32.mxu0 0.0
      %734 = vmatmul.mubr.f32.gmra.mxu0 %v613
      %v735 = vpop.f32.mrf.mxu0
      %v736 = vadd.f32 0.0, %v735
      %v737 = vpop.f32.mrf.mxu0
      %738 = vmatprep.mubr.f32.mxu0 0.0
      %739 = vmatmul.mubr.f32.gmra.mxu0 %v616
      %v740 = vpop.f32.mrf.mxu0
      %v741 = vadd.f32 0.0, %v740
      %v742 = vpop.f32.mrf.mxu0
      %743 = vmatprep.mubr.f32.mxu0 0.0
      %744 = vmatmul.mubr.f32.gmra.mxu0 %v619
      %v745 = vpop.f32.mrf.mxu0
      %v746 = vadd.f32 0.0, %v745
      %v747 = vpop.f32.mrf.mxu0
      %748 = vmatprep.mubr.f32.mxu0 0.0
      %749 = vmatmul.mubr.f32.gmra.mxu0 %v622
      %v750 = vpop.f32.mrf.mxu0
      %v751 = vadd.f32 0.0, %v750
      %v752 = vpop.f32.mrf.mxu0
      %753 = vmatprep.mubr.f32.mxu0 0.0
      %754 = vmatmul.mubr.f32.gmra.mxu0 %v625
      %v755 = vpop.f32.mrf.mxu0
      %v756 = vadd.f32 0.0, %v755
      %v757 = vpop.f32.mrf.mxu0
      %758 = vmatprep.mubr.f32.mxu0 0.0
      %759 = vmatmul.mubr.f32.gmra.mxu0 %v628
      %v760 = vpop.f32.mrf.mxu0
      %v761 = vadd.f32 0.0, %v760
      %v762 = vpop.f32.mrf.mxu0
      %763 = vmatprep.mubr.f32.mxu0 0.0
      %764 = vmatmul.mubr.f32.gmra.mxu0 %v631
      %v765 = vpop.f32.mrf.mxu0
      %v766 = vadd.f32 0.0, %v765
      %v767 = vpop.f32.mrf.mxu0
      %768 = vmatprep.mubr.f32.mxu0 0.0
      %769 = vmatmul.mubr.f32.gmra.mxu0 %v634
      %v770 = vpop.f32.mrf.mxu0
      %v771 = vadd.f32 0.0, %v770
      %v772 = vpop.f32.mrf.mxu0
      %773 = vmatprep.mubr.f32.mxu0 0.0
      %774 = vmatmul.mubr.f32.gmra.mxu0 %v637
      %v775 = vpop.f32.mrf.mxu0
      %v776 = vadd.f32 0.0, %v775
      %v777 = vpop.f32.mrf.mxu0
      %778 = vmatprep.mubr.f32.mxu0 0.0
      %779 = vmatmul.mubr.f32.gmra.mxu0 %v640
      %v780 = vpop.f32.mrf.mxu0
      %v781 = vadd.f32 0.0, %v780
      %v782 = vpop.f32.mrf.mxu0
      %783 = vmatprep.mubr.f32.mxu0 0.0
      %784 = vmatmul.mubr.f32.gmra.mxu0 %v643
      %v785 = vpop.f32.mrf.mxu0
      %v786 = vadd.f32 0.0, %v785
      %v787 = vpop.f32.mrf.mxu0
      %788 = vmatprep.mubr.f32.mxu0 0.0
      %789 = vmatmul.mubr.f32.gmra.mxu0 %v646
      %v790 = vpop.f32.mrf.mxu0
      %v791 = vadd.f32 0.0, %v790
      %v792 = vpop.f32.mrf.mxu0
      %793 = vmatprep.mubr.f32.mxu0 0.0
      %794 = vmatmul.mubr.f32.gmra.mxu0 %v649
      %v795 = vpop.f32.mrf.mxu0
      %v796 = vadd.f32 0.0, %v795
      %v797 = vpop.f32.mrf.mxu0
      %798 = vmatprep.mubr.f32.mxu0 0.0
      %799 = vmatmul.mubr.f32.gmra.mxu0 %v652
      %v800 = vpop.f32.mrf.mxu0
      %v801 = vadd.f32 0.0, %v800
      %v802 = vpop.f32.mrf.mxu0
      %803 = vdwg.mxu0
      %vm804 = vcmask 277504
      %805 = vst.msk [vmem:[%s172] sm:$0xff] %vm804, %v721
      %806 = vst.msk [vmem:[%s172 + $0x8] sm:$0xff] %vm804, %v726
      %807 = vst.msk [vmem:[%s172 + $0x10] sm:$0xff] %vm804, %v731
      %808 = vst.msk [vmem:[%s172 + $0x18] sm:$0xff] %vm804, %v736
      %809 = vst.msk [vmem:[%s172 + $0x20] sm:$0xff] %vm804, %v741
      %810 = vst.msk [vmem:[%s172 + $0x28] sm:$0xff] %vm804, %v746
      %811 = vst.msk [vmem:[%s172 + $0x30] sm:$0xff] %vm804, %v751
      %812 = vst.msk [vmem:[%s172 + $0x38] sm:$0xff] %vm804, %v756
      %813 = vst.msk [vmem:[%s172 + $0x40] sm:$0xff] %vm804, %v761
      %814 = vst.msk [vmem:[%s172 + $0x48] sm:$0xff] %vm804, %v766
      %815 = vst.msk [vmem:[%s172 + $0x50] sm:$0xff] %vm804, %v771
      %816 = vst.msk [vmem:[%s172 + $0x58] sm:$0xff] %vm804, %v776
      %817 = vst.msk [vmem:[%s172 + $0x60] sm:$0xff] %vm804, %v781
      %818 = vst.msk [vmem:[%s172 + $0x68] sm:$0xff] %vm804, %v786
      %819 = vst.msk [vmem:[%s172 + $0x70] sm:$0xff] %vm804, %v791
      %820 = vst.msk [vmem:[%s172 + $0x78] sm:$0xff] %vm804, %v796
      %821 = vst.msk [vmem:[%s172 + $0x80] sm:$0xff] %vm804, %v801
      %s822 = smul.u32 17, %s14
      %p823 = scmp.lt.s32.totalorder %s822, 33
      %s824 = scalar_select %p823, %s822, 33
      %s825 = smul.addr %s824, 8
      %s826 = scalar_lea.vmem %s3, %s825
      // Predicated region
      $region33: #{tpu_custom_call.1} parent=31 // pred_check
        %p827 = pneg %p100
      $region34: #{tpu_custom_call.1} parent=31 // pred_check_branch
        %829 = sbr.rel (%p827) target = $region36
      $region35: #{tpu_custom_call.1} parent=31 // pred_region
        %s830 = smul.u32 17, %s14
      $region36: #{tpu_custom_call.1} parent=31 // pred_fallthru
        _
    $region32: #{tpu_custom_call.1} parent=5 // pred_fallthru
      _
    %p831 = scmp.le.s32.totalorder 2, %s9
    // Predicated region
    $region37: #{tpu_custom_call.1} parent=5 // pred_check
      %p832 = pneg %p831
    $region38: #{tpu_custom_call.1} parent=5 // pred_check_branch
      %834 = sbr.rel (%p832) target = $region40
    $region39: #{tpu_custom_call.1} parent=5 // pred_region
      %s835 = ssub.s32 %s9, 2
      // Predicated region
      $region41: #{tpu_custom_call.1} parent=39 // pred_check
        %p836 = pneg %p106
      $region42: #{tpu_custom_call.1} parent=39 // pred_check_branch
        %838 = sbr.rel (%p836) target = $region44
      $region43: #{tpu_custom_call.1} parent=39 // pred_region
        %s839 = smul.u32 17, %s15
        %p840 = scmp.lt.s32.totalorder %s839, 33
        %s841 = scalar_select %p840, %s839, 33
        %s842 = smul.addr %s841, 8
        %s843 = scalar_lea.vmem %s3, %s842
      $region44: #{tpu_custom_call.1} parent=39 // pred_fallthru
        _
    $region40: #{tpu_custom_call.1} parent=5 // pred_fallthru
      _
  $region6: #{tpu_custom_call.1} parent=0 // loop_footer
    %s13 = sadd.s32 1, %s9
  $region7: #{tpu_custom_call.1} parent=0 // loop_footer_branch
    %8 = sbr.rel target = $region3
  $region8: #{tpu_custom_call.1} parent=0 // loop_exit
    _

</llo_original>
